<compile_context>
chip_gen: v6e
topology: v6e:2x2x1
jax: 0.10.0
libtpu: 0.0.40
codegen_flags: <defaults>
</compile_context>

<pallas_src>
import jax
import jax.numpy as jnp
from jax import lax
from jax.experimental import pallas as pl
from jax.experimental.pallas import tpu as pltpu


def _make_residual_block_kernel(dilation, T_out, skip_start):
    """dilation / T_out / skip_start are trace-time Python ints (static slices)."""

    def kernel(x_ref, wd_ref, wr_ref, br_ref, ws_ref, bs_ref, res_ref, skip_ref):
        xb = x_ref[0]                                    # (C_res, T), channel-major
        x0 = xb[:, :T_out]                               # tap at t
        x1 = xb[:, dilation:dilation + T_out]            # tap at t + d  (== input_cut)

        # Fused dilated causal conv (kernel_size=2, no bias): one MXU matmul, K = 2*C_res.
        x01 = jnp.concatenate([x0, x1], axis=0)          # (2*C_res, T_out)
        pre = jnp.dot(wd_ref[...], x01,
                      preferred_element_type=jnp.float32)  # (C_res, T_out)

        # Gated activation unit: tanh(p)*sigmoid(p) == (t + t^2)/(1 + t^2), t = tanh(p/2).
        t = jnp.tanh(pre * 0.5)
        tt = t * t
        gated = (t + tt) / (1.0 + tt)

        # 1x1 residual conv (+bias) and residual add (input_cut == x1).
        res = (jnp.dot(wr_ref[...], gated, preferred_element_type=jnp.float32)
               + br_ref[...] + x1)
        res_ref[0] = res.astype(res_ref.dtype)

        # 1x1 skip conv (+bias), only on the last skip_size time steps.
        g_tail = gated[:, skip_start:]                   # (C_res, skip_len)
        skip = (jnp.dot(ws_ref[...], g_tail, preferred_element_type=jnp.float32)
                + bs_ref[...])
        skip_ref[0] = skip.astype(skip_ref.dtype)

    return kernel


def residual_block_forward(x, params, dilation, skip_size):
    """x: (B, C_res, T) float32 (PyTorch NCL layout).

    Returns (res: (B, C_res, T_out), skip: (B, C_skip, min(skip_size, T_out)))."""
    w_dil, w_res, b_res, w_skip, b_skip = params
    B, C_res, T = x.shape
    C_skip = w_skip.shape[0]
    T_out = T - dilation                                 # k=2 valid dilated conv
    skip_start = max(T_out - skip_size, 0)
    skip_len = T_out - skip_start

    # PyTorch conv weights (C_out, C_in, k) are already channel-major for W @ x.
    Wd = jnp.concatenate([w_dil[:, :, 0], w_dil[:, :, 1]], axis=1)   # (C_res, 2*C_res)
    Wr = w_res[:, :, 0]                                              # (C_res, C_res)
    Ws = w_skip[:, :, 0]                                             # (C_skip, C_res)
    br = b_res.reshape(C_res, 1)
    bs = b_skip.reshape(C_skip, 1)

    kernel = _make_residual_block_kernel(dilation, T_out, skip_start)

    res, skip = pl.pallas_call(
        kernel,
        out_shape=(
            jax.ShapeDtypeStruct((B, C_res, T_out), jnp.float32),
            jax.ShapeDtypeStruct((B, C_skip, skip_len), jnp.float32),
        ),
        grid_spec=pltpu.PrefetchScalarGridSpec(
            num_scalar_prefetch=0,
            grid=(B,),
            in_specs=[
                pl.BlockSpec((1, C_res, T), lambda b: (b, 0, 0)),        # x (once)
                pl.BlockSpec((C_res, 2 * C_res), lambda b: (0, 0)),      # Wd = [W0|W1]
                pl.BlockSpec((C_res, C_res), lambda b: (0, 0)),          # Wr
                pl.BlockSpec((C_res, 1), lambda b: (0, 0)),              # br
                pl.BlockSpec((C_skip, C_res), lambda b: (0, 0)),         # Ws
                pl.BlockSpec((C_skip, 1), lambda b: (0, 0)),             # bs
            ],
            out_specs=[
                pl.BlockSpec((1, C_res, T_out), lambda b: (b, 0, 0)),
                pl.BlockSpec((1, C_skip, skip_len), lambda b: (b, 0, 0)),
            ],
        ),
        compiler_params=pltpu.CompilerParams(
            dimension_semantics=("parallel",)),
    )(x, Wd, Wr, br, Ws, bs)

    return res, skip


def _reference_forward(x, params, dilation, skip_size):
    """Pure-JAX reference mirroring the PyTorch module exactly (NCL convs)."""
    w_dil, w_res, b_res, w_skip, b_skip = params
    dn = ('NCH', 'OIH', 'NCH')
    pre = lax.conv_general_dilated(x, w_dil, window_strides=(1,), padding='VALID',
                                   rhs_dilation=(dilation,), dimension_numbers=dn)
    gated = jnp.tanh(pre) * jax.nn.sigmoid(pre)
    res = lax.conv_general_dilated(gated, w_res, window_strides=(1,), padding='VALID',
                                   dimension_numbers=dn) + b_res[None, :, None]
    res = res + x[:, :, -res.shape[2]:]
    skip = lax.conv_general_dilated(gated, w_skip, window_strides=(1,), padding='VALID',
                                    dimension_numbers=dn) + b_skip[None, :, None]
    skip = skip[:, :, -skip_size:]
    return res, skip


if __name__ == "__main__":
    B, C_res, C_skip, T = 2, 32, 32, 64
    dilation, skip_size = 2, 32

    key = jax.random.PRNGKey(0)
    k_x, k1, k2, k3, k4, k5 = jax.random.split(key, 6)

    x = jax.random.normal(k_x, (B, C_res, T), dtype=jnp.float32)

    # Deterministic parameter init (PyTorch Conv1d weight layout: (C_out, C_in, k))
    w_dil = jax.random.normal(k1, (C_res, C_res, 2), dtype=jnp.float32) * 0.1
    w_res = jax.random.normal(k2, (C_res, C_res, 1), dtype=jnp.float32) * 0.1
    b_res = jax.random.normal(k3, (C_res,), dtype=jnp.float32) * 0.1
    w_skip = jax.random.normal(k4, (C_skip, C_res, 1), dtype=jnp.float32) * 0.1
    b_skip = jax.random.normal(k5, (C_skip,), dtype=jnp.float32) * 0.1
    params = (w_dil, w_res, b_res, w_skip, b_skip)

    res, skip = residual_block_forward(x, params, dilation, skip_size)
    jax.block_until_ready((res, skip))

    res_ref, skip_ref = _reference_forward(x, params, dilation, skip_size)
    assert res.shape == (B, C_res, T - dilation)
    assert skip.shape == (B, C_skip, skip_size)
    assert jnp.allclose(res, res_ref, atol=1e-4, rtol=1e-4)
    assert jnp.allclose(skip, skip_ref, atol=1e-4, rtol=1e-4)

    print("KERNEL_OK")
</pallas_src>

<mosaic_0001>
module attributes {stable_mosaic.version = 11 : i64} {
  func.func @kernel(%arg0: i32, %arg1: memref<1x32x64xf32, #tpu.memory_space<vmem>>, %arg2: memref<32x64xf32, #tpu.memory_space<vmem>>, %arg3: memref<32x32xf32, #tpu.memory_space<vmem>>, %arg4: memref<32x1xf32, #tpu.memory_space<vmem>>, %arg5: memref<32x32xf32, #tpu.memory_space<vmem>>, %arg6: memref<32x1xf32, #tpu.memory_space<vmem>>, %arg7: memref<1x32x62xf32, #tpu.memory_space<vmem>>, %arg8: memref<1x32x32xf32, #tpu.memory_space<vmem>>) attributes {dimension_semantics = [#tpu.dimension_semantics<parallel>], iteration_bounds = array<i64: 2>, scalar_prefetch = 0 : i64, scratch_operands = 0 : i64, tpu.core_type = #tpu.core_type<tc>, window_params = [{transform_indices = @transform_0, window_bounds = array<i64: 1, 32, 64>}, {pipeline_mode = #tpu.pipeline_mode<synchronous>, transform_indices = @transform_1, window_bounds = array<i64: 32, 64>}, {pipeline_mode = #tpu.pipeline_mode<synchronous>, transform_indices = @transform_2, window_bounds = array<i64: 32, 32>}, {pipeline_mode = #tpu.pipeline_mode<synchronous>, transform_indices = @transform_3, window_bounds = array<i64: 32, 1>}, {pipeline_mode = #tpu.pipeline_mode<synchronous>, transform_indices = @transform_4, window_bounds = array<i64: 32, 32>}, {pipeline_mode = #tpu.pipeline_mode<synchronous>, transform_indices = @transform_5, window_bounds = array<i64: 32, 1>}, {transform_indices = @transform_6, window_bounds = array<i64: 1, 32, 62>}, {transform_indices = @transform_7, window_bounds = array<i64: 1, 32, 32>}]} {
    %c0 = arith.constant 0 : index
    %c0_0 = arith.constant 0 : index
    %c0_1 = arith.constant 0 : index
    %0 = vector.load %arg1[%c0, %c0_0, %c0_1] : memref<1x32x64xf32, #tpu.memory_space<vmem>>, vector<1x32x64xf32>
    %1 = vector.shape_cast %0 : vector<1x32x64xf32> to vector<32x64xf32>
    %2 = vector.extract_strided_slice %1 {offsets = [0, 0], sizes = [32, 62], strides = [1, 1]} : vector<32x64xf32> to vector<32x62xf32>
    %3 = vector.extract_strided_slice %1 {offsets = [0, 2], sizes = [32, 62], strides = [1, 1]} : vector<32x64xf32> to vector<32x62xf32>
    %4 = tpu.concatenate %2, %3 in 0 : vector<32x62xf32>, vector<32x62xf32> -> vector<64x62xf32>
    %c0_2 = arith.constant 0 : index
    %c0_3 = arith.constant 0 : index
    %5 = vector.load %arg2[%c0_2, %c0_3] : memref<32x64xf32, #tpu.memory_space<vmem>>, vector<32x64xf32>
    %cst = arith.constant dense<0.000000e+00> : vector<32x62xf32>
    %6 = tpu.matmul %5, %4, %cst {dimension_numbers = #tpu.dot_dimension_numbers<[1], [0], [0], [1], [0, 0, 1, 1], [], []>} : vector<32x64xf32>, vector<64x62xf32>, vector<32x62xf32> -> vector<32x62xf32>
    %cst_4 = arith.constant 5.000000e-01 : f32
    %7 = vector.broadcast %cst_4 : f32 to vector<32x62xf32>
    %8 = arith.mulf %6, %7 : vector<32x62xf32>
    %9 = math.tanh %8 : vector<32x62xf32>
    %10 = arith.mulf %9, %9 : vector<32x62xf32>
    %11 = arith.addf %9, %10 : vector<32x62xf32>
    %cst_5 = arith.constant 1.000000e+00 : f32
    %12 = vector.broadcast %cst_5 : f32 to vector<32x62xf32>
    %13 = arith.addf %12, %10 : vector<32x62xf32>
    %14 = arith.divf %11, %13 : vector<32x62xf32>
    %c0_6 = arith.constant 0 : index
    %c0_7 = arith.constant 0 : index
    %15 = vector.load %arg3[%c0_6, %c0_7] : memref<32x32xf32, #tpu.memory_space<vmem>>, vector<32x32xf32>
    %cst_8 = arith.constant dense<0.000000e+00> : vector<32x62xf32>
    %16 = tpu.matmul %15, %14, %cst_8 {dimension_numbers = #tpu.dot_dimension_numbers<[1], [0], [0], [1], [0, 0, 1, 1], [], []>} : vector<32x32xf32>, vector<32x62xf32>, vector<32x62xf32> -> vector<32x62xf32>
    %c0_9 = arith.constant 0 : index
    %c0_10 = arith.constant 0 : index
    %17 = vector.load %arg4[%c0_9, %c0_10] : memref<32x1xf32, #tpu.memory_space<vmem>>, vector<32x1xf32>
    %18 = vector.broadcast %17 : vector<32x1xf32> to vector<32x62xf32>
    %19 = arith.addf %16, %18 : vector<32x62xf32>
    %20 = arith.addf %19, %3 : vector<32x62xf32>
    %c0_11 = arith.constant 0 : index
    %c0_12 = arith.constant 0 : index
    %c0_13 = arith.constant 0 : index
    %21 = vector.load %arg7[%c0_11, %c0_12, %c0_13] : memref<1x32x62xf32, #tpu.memory_space<vmem>>, vector<1x32x62xf32>
    %22 = vector.shape_cast %21 : vector<1x32x62xf32> to vector<32x62xf32>
    %23 = vector.shape_cast %20 : vector<32x62xf32> to vector<1x32x62xf32>
    tpu.vector_store %arg7[%c0_11, %c0_12, %c0_13], %23 {strides = array<i32>} : memref<1x32x62xf32, #tpu.memory_space<vmem>>, vector<1x32x62xf32>,
    %24 = vector.extract_strided_slice %14 {offsets = [0, 30], sizes = [32, 32], strides = [1, 1]} : vector<32x62xf32> to vector<32x32xf32>
    %c0_14 = arith.constant 0 : index
    %c0_15 = arith.constant 0 : index
    %25 = vector.load %arg5[%c0_14, %c0_15] : memref<32x32xf32, #tpu.memory_space<vmem>>, vector<32x32xf32>
    %cst_16 = arith.constant dense<0.000000e+00> : vector<32x32xf32>
    %26 = tpu.matmul %25, %24, %cst_16 {dimension_numbers = #tpu.dot_dimension_numbers<[1], [0], [0], [1], [0, 0, 1, 1], [], []>} : vector<32x32xf32>, vector<32x32xf32>, vector<32x32xf32> -> vector<32x32xf32>
    %c0_17 = arith.constant 0 : index
    %c0_18 = arith.constant 0 : index
    %27 = vector.load %arg6[%c0_17, %c0_18] : memref<32x1xf32, #tpu.memory_space<vmem>>, vector<32x1xf32>
    %28 = vector.broadcast %27 : vector<32x1xf32> to vector<32x32xf32>
    %29 = arith.addf %26, %28 : vector<32x32xf32>
    %c0_19 = arith.constant 0 : index
    %c0_20 = arith.constant 0 : index
    %c0_21 = arith.constant 0 : index
    %30 = vector.load %arg8[%c0_19, %c0_20, %c0_21] : memref<1x32x32xf32, #tpu.memory_space<vmem>>, vector<1x32x32xf32>
    %31 = vector.shape_cast %30 : vector<1x32x32xf32> to vector<32x32xf32>
    %32 = vector.shape_cast %29 : vector<32x32xf32> to vector<1x32x32xf32>
    tpu.vector_store %arg8[%c0_19, %c0_20, %c0_21], %32 {strides = array<i32>} : memref<1x32x32xf32, #tpu.memory_space<vmem>>, vector<1x32x32xf32>,
    return
  }
  func.func @transform_0(%arg0: i32) -> (i32, i32, i32) {
    %c0_i32 = arith.constant 0 : i32
    %c0_i32_0 = arith.constant 0 : i32
    %c0_i32_1 = arith.constant 0 : i32
    return %arg0, %c0_i32, %c0_i32_0 : i32, i32, i32
  }
  func.func @transform_1(%arg0: i32) -> (i32, i32) {
    %c0_i32 = arith.constant 0 : i32
    %c0_i32_0 = arith.constant 0 : i32
    %c0_i32_1 = arith.constant 0 : i32
    return %c0_i32, %c0_i32_0 : i32, i32
  }
  func.func @transform_2(%arg0: i32) -> (i32, i32) {
    %c0_i32 = arith.constant 0 : i32
    %c0_i32_0 = arith.constant 0 : i32
    %c0_i32_1 = arith.constant 0 : i32
    return %c0_i32, %c0_i32_0 : i32, i32
  }
  func.func @transform_3(%arg0: i32) -> (i32, i32) {
    %c0_i32 = arith.constant 0 : i32
    %c0_i32_0 = arith.constant 0 : i32
    %c0_i32_1 = arith.constant 0 : i32
    return %c0_i32, %c0_i32_0 : i32, i32
  }
  func.func @transform_4(%arg0: i32) -> (i32, i32) {
    %c0_i32 = arith.constant 0 : i32
    %c0_i32_0 = arith.constant 0 : i32
    %c0_i32_1 = arith.constant 0 : i32
    return %c0_i32, %c0_i32_0 : i32, i32
  }
  func.func @transform_5(%arg0: i32) -> (i32, i32) {
    %c0_i32 = arith.constant 0 : i32
    %c0_i32_0 = arith.constant 0 : i32
    %c0_i32_1 = arith.constant 0 : i32
    return %c0_i32, %c0_i32_0 : i32, i32
  }
  func.func @transform_6(%arg0: i32) -> (i32, i32, i32) {
    %c0_i32 = arith.constant 0 : i32
    %c0_i32_0 = arith.constant 0 : i32
    %c0_i32_1 = arith.constant 0 : i32
    return %arg0, %c0_i32, %c0_i32_0 : i32, i32, i32
  }
  func.func @transform_7(%arg0: i32) -> (i32, i32, i32) {
    %c0_i32 = arith.constant 0 : i32
    %c0_i32_0 = arith.constant 0 : i32
    %c0_i32_1 = arith.constant 0 : i32
    return %arg0, %c0_i32, %c0_i32_0 : i32, i32, i32
  }
}

</mosaic_0001>

<llo_original>
// kernel: tpu_custom_call.1
$region0: #{tpu_custom_call.1}
  #allocation0 [shape = 'u32[]', space=smem, size = 0x4, offset = 0x4, fixed_abs, tag = 'smem constant byte address 0x4 - core index']
  #allocation1 [shape = 'u32[144,128]{1,0:T(1,128)}', space=vmem, size = 0x12000, scoped, tag = 'internal scratch']
  %s0 = inlined_call_operand.vmem [shape: f32[2,32,64], index: 0, kind: input, shape index: {}]
  %s1 = inlined_call_operand.hbm [shape: f32[32,64], index: 1, kind: input, shape index: {}]
  %s2 = inlined_call_operand.hbm [shape: f32[32,32], index: 2, kind: input, shape index: {}]
  %s3 = inlined_call_operand.vmem [shape: f32[32,1], index: 3, kind: input, shape index: {}]
  %s4 = inlined_call_operand.hbm [shape: f32[32,32], index: 4, kind: input, shape index: {}]
  %s5 = inlined_call_operand.vmem [shape: f32[32,1], index: 5, kind: input, shape index: {}]
  %s6 = inlined_call_operand.hbm [shape: f32[2,32,62], index: 6, kind: output, shape index: {0}]
  %s7 = inlined_call_operand.hbm [shape: f32[2,32,32], index: 7, kind: output, shape index: {1}]
  %8 = xla_tuple %s6, %s7
  %s9 = sld [smem:[#allocation0]]
  $region77: #{tpu_custom_call.1} parent=0
    _
  %s11 = ssub.s32 1, %s9
  %s12 = scalar_select 0, %s11, %s9
  $region1: #{tpu_custom_call.1} parent=0
    #allocation2 [shape = 'u8[16384]{0}', space=vmem, size = 0x4000, scoped, tag = 'input window, operand 1, single buffered']
    #allocation3 [shape = 's32[2]{0}', space=sflag, size = 0x8, scoped, tag = 'scoped memory for tpu_custom_call.1']
    #allocation4 [shape = 's32[2]{0}', space=sflag, size = 0x8, scoped, tag = 'scoped memory for tpu_custom_call.1']
    #allocation5 [shape = 'u8[16384]{0}', space=vmem, size = 0x4000, scoped, tag = 'input window, operand 2, single buffered']
    #allocation6 [shape = 's32[1]{0}', space=sflag, size = 0x4, scoped, tag = 'scoped memory for tpu_custom_call.1']
    #allocation7 [shape = 'u8[16384]{0}', space=vmem, size = 0x4000, scoped, tag = 'input window, operand 4, single buffered']
    #allocation8 [shape = 'u8[32768]{0}', space=vmem, size = 0x8000, scoped, tag = 'output window, operand 0']
    #allocation9 [shape = 'u8[32768]{0}', space=vmem, size = 0x8000, scoped, tag = 'output window, operand 1']
    #allocation10 [shape = 's32[2]{0}', space=sflag, size = 0x8, scoped, tag = 'scoped memory for tpu_custom_call.1']
    %13 = vsyncpa [#allocation3], 0
    %14 = vsyncpa [#allocation6], 0
    %15 = vsyncpa [#allocation4], 0
    %s16 = scalar_lea.sflag [#allocation4], 1
    %17 = vsyncpa %s16, 0
    %18 = vsyncpa [#allocation10], 0
    %s19 = scalar_lea.sflag [#allocation10], 1
    %20 = vsyncpa %s19, 0
    loop: start=0, step=1, limit=4
    $region2: #{tpu_custom_call.1} parent=1 // loop_pre_header
      _
    $region3: #{tpu_custom_call.1} parent=1 // loop_header
      %s22 = sphi 0, %s26
      %p23 = scmp.ge.s32.totalorder %s22, 4
      %s32 = sphi 0, %s34
      %s35 = sphi 0, %s32
      %s36 = sphi 0, %s35
      %s52 = sphi 0, %s36
      %s56 = sphi 0, %s56
      %s58 = sphi 0, %s56
      %s59 = sphi 0, %s58
      %s73 = sphi 0, %s59
      %s77 = sphi 0, %s77
      %s79 = sphi 0, %s77
      %s80 = sphi 0, %s79
      %s94 = sphi 0, %s80
      %s98 = sphi 0, %s98
      %s100 = sphi 0, %s98
      %s101 = sphi 0, %s100
      %s115 = sphi 0, %s101
      %s119 = sphi 0, %s119
      %s121 = sphi 0, %s119
      %s122 = sphi 0, %s121
      %s136 = sphi 0, %s122
      %s140 = sphi 0, %s140
      %s142 = sphi 0, %s140
      %s143 = sphi 0, %s142
      %s157 = sphi 0, %s143
      %s163 = sphi 0, %s165
      %s166 = sphi 0, %s163
      %s167 = sphi 0, %s166
      %s183 = sphi 0, %s167
      %s189 = sphi 0, %s191
      %s192 = sphi 0, %s189
      %s193 = sphi 0, %s192
      %s209 = sphi 0, %s193
    $region4: #{tpu_custom_call.1} parent=1 // loop_header_branch
      %25 = sbr.rel (%p23) target = $region8
    $region5: #{tpu_custom_call.1} parent=1 // loop_body
      %s27 = ssub.s32 %s22, 1
      %s28 = ssub.s32 %s22, 2
      %s29 = sadd.s32 %s22, 1
      %s30 = ssub.s32 %s22, %s29
      %p31 = scmp.eq.s32.totalorder %s30, 0
      %s33 = sadd.s32 %s32, 1
      %s34 = scalar_select %p31, %s32, %s33
      %p37 = pneg %p31
      %p38 = scmp.eq.s32.totalorder %s22, 1
      %p39 = por %p37, %p38
      %p40 = scmp.ne.s32.totalorder %s32, %s35
      %p41 = scmp.eq.s32.totalorder %s22, 0
      %p42 = por %p40, %p41
      %p43 = scmp.ne.s32.totalorder %s32, %s35
      %p44 = scmp.eq.s32.totalorder %s27, 1
      %p45 = por %p43, %p44
      %p46 = scmp.ne.s32.totalorder %s35, %s36
      %p47 = scmp.eq.s32.totalorder %s27, 0
      %p48 = por %p46, %p47
      %p49 = scmp.ne.s32.totalorder %s35, %s36
      %p50 = scmp.eq.s32.totalorder %s28, 1
      %p51 = por %p49, %p50
      %p53 = scmp.ne.s32.totalorder %s36, %s52
      %p54 = scmp.eq.s32.totalorder %s28, 0
      %p55 = por %p53, %p54
      %s57 = sadd.s32 %s56, 1
      %p60 = scmp.eq.s32.totalorder %s22, 1
      %p61 = scmp.ne.s32.totalorder %s56, %s58
      %p62 = scmp.eq.s32.totalorder %s22, 0
      %p63 = por %p61, %p62
      %p64 = scmp.ne.s32.totalorder %s56, %s58
      %p65 = scmp.eq.s32.totalorder %s27, 1
      %p66 = por %p64, %p65
      %p67 = scmp.ne.s32.totalorder %s58, %s59
      %p68 = scmp.eq.s32.totalorder %s27, 0
      %p69 = por %p67, %p68
      %p70 = scmp.ne.s32.totalorder %s58, %s59
      %p71 = scmp.eq.s32.totalorder %s28, 1
      %p72 = por %p70, %p71
      %p74 = scmp.ne.s32.totalorder %s59, %s73
      %p75 = scmp.eq.s32.totalorder %s28, 0
      %p76 = por %p74, %p75
      %s78 = sadd.s32 %s77, 1
      %p81 = scmp.eq.s32.totalorder %s22, 1
      %p82 = scmp.ne.s32.totalorder %s77, %s79
      %p83 = scmp.eq.s32.totalorder %s22, 0
      %p84 = por %p82, %p83
      %p85 = scmp.ne.s32.totalorder %s77, %s79
      %p86 = scmp.eq.s32.totalorder %s27, 1
      %p87 = por %p85, %p86
      %p88 = scmp.ne.s32.totalorder %s79, %s80
      %p89 = scmp.eq.s32.totalorder %s27, 0
      %p90 = por %p88, %p89
      %p91 = scmp.ne.s32.totalorder %s79, %s80
      %p92 = scmp.eq.s32.totalorder %s28, 1
      %p93 = por %p91, %p92
      %p95 = scmp.ne.s32.totalorder %s80, %s94
      %p96 = scmp.eq.s32.totalorder %s28, 0
      %p97 = por %p95, %p96
      %s99 = sadd.s32 %s98, 1
      %p102 = scmp.eq.s32.totalorder %s22, 1
      %p103 = scmp.ne.s32.totalorder %s98, %s100
      %p104 = scmp.eq.s32.totalorder %s22, 0
      %p105 = por %p103, %p104
      %p106 = scmp.ne.s32.totalorder %s98, %s100
      %p107 = scmp.eq.s32.totalorder %s27, 1
      %p108 = por %p106, %p107
      %p109 = scmp.ne.s32.totalorder %s100, %s101
      %p110 = scmp.eq.s32.totalorder %s27, 0
      %p111 = por %p109, %p110
      %p112 = scmp.ne.s32.totalorder %s100, %s101
      %p113 = scmp.eq.s32.totalorder %s28, 1
      %p114 = por %p112, %p113
      %p116 = scmp.ne.s32.totalorder %s101, %s115
      %p117 = scmp.eq.s32.totalorder %s28, 0
      %p118 = por %p116, %p117
      %s120 = sadd.s32 %s119, 1
      %p123 = scmp.eq.s32.totalorder %s22, 1
      %p124 = scmp.ne.s32.totalorder %s119, %s121
      %p125 = scmp.eq.s32.totalorder %s22, 0
      %p126 = por %p124, %p125
      %p127 = scmp.ne.s32.totalorder %s119, %s121
      %p128 = scmp.eq.s32.totalorder %s27, 1
      %p129 = por %p127, %p128
      %p130 = scmp.ne.s32.totalorder %s121, %s122
      %p131 = scmp.eq.s32.totalorder %s27, 0
      %p132 = por %p130, %p131
      %p133 = scmp.ne.s32.totalorder %s121, %s122
      %p134 = scmp.eq.s32.totalorder %s28, 1
      %p135 = por %p133, %p134
      %p137 = scmp.ne.s32.totalorder %s122, %s136
      %p138 = scmp.eq.s32.totalorder %s28, 0
      %p139 = por %p137, %p138
      %s141 = sadd.s32 %s140, 1
      %p144 = scmp.eq.s32.totalorder %s22, 1
      %p145 = scmp.ne.s32.totalorder %s140, %s142
      %p146 = scmp.eq.s32.totalorder %s22, 0
      %p147 = por %p145, %p146
      %p148 = scmp.ne.s32.totalorder %s140, %s142
      %p149 = scmp.eq.s32.totalorder %s27, 1
      %p150 = por %p148, %p149
      %p151 = scmp.ne.s32.totalorder %s142, %s143
      %p152 = scmp.eq.s32.totalorder %s27, 0
      %p153 = por %p151, %p152
      %p154 = scmp.ne.s32.totalorder %s142, %s143
      %p155 = scmp.eq.s32.totalorder %s28, 1
      %p156 = por %p154, %p155
      %p158 = scmp.ne.s32.totalorder %s143, %s157
      %p159 = scmp.eq.s32.totalorder %s28, 0
      %p160 = por %p158, %p159
      %s161 = ssub.s32 %s22, %s29
      %p162 = scmp.eq.s32.totalorder %s161, 0
      %s164 = sadd.s32 %s163, 1
      %s165 = scalar_select %p162, %s163, %s164
      %p168 = pneg %p162
      %p169 = scmp.eq.s32.totalorder %s22, 1
      %p170 = por %p168, %p169
      %p171 = scmp.ne.s32.totalorder %s163, %s166
      %p172 = scmp.eq.s32.totalorder %s22, 0
      %p173 = por %p171, %p172
      %p174 = scmp.ne.s32.totalorder %s163, %s166
      %p175 = scmp.eq.s32.totalorder %s27, 1
      %p176 = por %p174, %p175
      %p177 = scmp.ne.s32.totalorder %s166, %s167
      %p178 = scmp.eq.s32.totalorder %s27, 0
      %p179 = por %p177, %p178
      %p180 = scmp.ne.s32.totalorder %s166, %s167
      %p181 = scmp.eq.s32.totalorder %s28, 1
      %p182 = por %p180, %p181
      %p184 = scmp.ne.s32.totalorder %s167, %s183
      %p185 = scmp.eq.s32.totalorder %s28, 0
      %p186 = por %p184, %p185
      %s187 = ssub.s32 %s22, %s29
      %p188 = scmp.eq.s32.totalorder %s187, 0
      %s190 = sadd.s32 %s189, 1
      %s191 = scalar_select %p188, %s189, %s190
      %p194 = pneg %p188
      %p195 = scmp.eq.s32.totalorder %s22, 1
      %p196 = por %p194, %p195
      %p197 = scmp.ne.s32.totalorder %s189, %s192
      %p198 = scmp.eq.s32.totalorder %s22, 0
      %p199 = por %p197, %p198
      %p200 = scmp.ne.s32.totalorder %s189, %s192
      %p201 = scmp.eq.s32.totalorder %s27, 1
      %p202 = por %p200, %p201
      %p203 = scmp.ne.s32.totalorder %s192, %s193
      %p204 = scmp.eq.s32.totalorder %s27, 0
      %p205 = por %p203, %p204
      %p206 = scmp.ne.s32.totalorder %s192, %s193
      %p207 = scmp.eq.s32.totalorder %s28, 1
      %p208 = por %p206, %p207
      %p210 = scmp.ne.s32.totalorder %s193, %s209
      %p211 = scmp.eq.s32.totalorder %s28, 0
      %p212 = por %p210, %p211
      %p213 = scmp.le.s32.totalorder 1, %s22
      %p214 = scmp.lt.s32.totalorder %s22, 3
      %p215 = pnand %p213, %p214
      %p216 = pneg %p215
      // Predicated region
      $region9: #{tpu_custom_call.1} parent=5 // pred_check
        _
      $region10: #{tpu_custom_call.1} parent=5 // pred_check_branch
        %218 = sbr.rel (%p215) target = $region12
      $region11: #{tpu_custom_call.1} parent=5 // pred_region
        %s219 = ssub.s32 %s22, 1
        // Predicated region
        $region13: #{tpu_custom_call.1} parent=11 // pred_check
          %p220 = pneg %p69
        $region14: #{tpu_custom_call.1} parent=11 // pred_check_branch
          %222 = sbr.rel (%p220) target = $region16
        $region15: #{tpu_custom_call.1} parent=11 // pred_region
          %s224 = ssub.s32 512, 512
          %225 = vsyncadd [#allocation3], %s224
          %s226 = sshll.u32 [#allocation2], 4
          %s227 = int_to_ptr.vmem [resolvable:$true] %s226
          %232 = dma.hbm_to_vmem [thread:$0]  %s1, 512, %s227, [#allocation3], 128, 128, 8
        $region16: #{tpu_custom_call.1} parent=11 // pred_fallthru
          _
        // Predicated region
        $region17: #{tpu_custom_call.1} parent=11 // pred_check
          %p233 = pneg %p90
        $region18: #{tpu_custom_call.1} parent=11 // pred_check_branch
          %235 = sbr.rel (%p233) target = $region20
        $region19: #{tpu_custom_call.1} parent=11 // pred_region
          %s237 = ssub.s32 512, 512
          %238 = vsyncadd [#allocation6], %s237
          %s239 = sshll.u32 [#allocation5], 4
          %s240 = int_to_ptr.vmem [resolvable:$true] %s239
          %245 = dma.hbm_to_vmem [thread:$0]  %s2, 512, %s240, [#allocation6], 128, 128, 8
        $region20: #{tpu_custom_call.1} parent=11 // pred_fallthru
          _
        // Predicated region
        $region21: #{tpu_custom_call.1} parent=11 // pred_check
          %p246 = pneg %p111
        $region22: #{tpu_custom_call.1} parent=11 // pred_check_branch
          %248 = sbr.rel (%p246) target = $region24
        $region23: #{tpu_custom_call.1} parent=11 // pred_region
          _
        $region24: #{tpu_custom_call.1} parent=11 // pred_fallthru
          _
        // Predicated region
        $region25: #{tpu_custom_call.1} parent=11 // pred_check
          %p249 = pneg %p132
        $region26: #{tpu_custom_call.1} parent=11 // pred_check_branch
          %251 = sbr.rel (%p249) target = $region28
        $region27: #{tpu_custom_call.1} parent=11 // pred_region
          %s253 = ssub.s32 512, 512
          %254 = vsyncadd [#allocation6], %s253
          %s255 = sshll.u32 [#allocation7], 4
          %s256 = int_to_ptr.vmem [resolvable:$true] %s255
          %261 = dma.hbm_to_vmem [thread:$0]  %s4, 512, %s256, [#allocation6], 128, 128, 8
        $region28: #{tpu_custom_call.1} parent=11 // pred_fallthru
          _
        // Predicated region
        $region29: #{tpu_custom_call.1} parent=11 // pred_check
          %p262 = pneg %p153
        $region30: #{tpu_custom_call.1} parent=11 // pred_check_branch
          %264 = sbr.rel (%p262) target = $region32
        $region31: #{tpu_custom_call.1} parent=11 // pred_region
          _
        $region32: #{tpu_custom_call.1} parent=11 // pred_fallthru
          _
      $region12: #{tpu_custom_call.1} parent=5 // pred_fallthru
        _
      %p265 = scmp.lt.s32.totalorder %s22, 2
      // Predicated region
      $region33: #{tpu_custom_call.1} parent=5 // pred_check
        %p266 = pneg %p265
      $region34: #{tpu_custom_call.1} parent=5 // pred_check_branch
        %268 = sbr.rel (%p266) target = $region36
      $region35: #{tpu_custom_call.1} parent=5 // pred_region
        // Predicated region
        $region37: #{tpu_custom_call.1} parent=35 // pred_check
          %p269 = pneg %p42
        $region38: #{tpu_custom_call.1} parent=35 // pred_check_branch
          %271 = sbr.rel (%p269) target = $region40
        $region39: #{tpu_custom_call.1} parent=35 // pred_region
          %p272 = scmp.lt.s32.totalorder %s22, 1
          %s273 = scalar_select %p272, %s22, 1
          %s274 = smul.addr %s273, 4
          %s275 = smul.addr %s274, 8
          %s276 = scalar_lea.vmem %s0, %s275
        $region40: #{tpu_custom_call.1} parent=35 // pred_fallthru
          _
      $region36: #{tpu_custom_call.1} parent=5 // pred_fallthru
        _
      %p277 = scmp.le.s32.totalorder 1, %s22
      %p278 = scmp.lt.s32.totalorder %s22, 3
      %p279 = pnand %p277, %p278
      %p280 = pneg %p279
      // Predicated region
      $region41: #{tpu_custom_call.1} parent=5 // pred_check
        _
      $region42: #{tpu_custom_call.1} parent=5 // pred_check_branch
        %282 = sbr.rel (%p279) target = $region44
      $region43: #{tpu_custom_call.1} parent=5 // pred_region
        %s283 = ssub.s32 %s22, 1
        // Predicated region
        $region45: #{tpu_custom_call.1} parent=43 // pred_check
          %p284 = pneg %p69
        $region46: #{tpu_custom_call.1} parent=43 // pred_check_branch
          %286 = sbr.rel (%p284) target = $region48
        $region47: #{tpu_custom_call.1} parent=43 // pred_region
          %287 = dma.done [#allocation3], 512
        $region48: #{tpu_custom_call.1} parent=43 // pred_fallthru
          _
        // Predicated region
        $region49: #{tpu_custom_call.1} parent=43 // pred_check
          %p288 = pneg %p90
        $region50: #{tpu_custom_call.1} parent=43 // pred_check_branch
          %290 = sbr.rel (%p288) target = $region52
        $region51: #{tpu_custom_call.1} parent=43 // pred_region
          %291 = dma.done [#allocation6], 512
        $region52: #{tpu_custom_call.1} parent=43 // pred_fallthru
          _
        // Predicated region
        $region53: #{tpu_custom_call.1} parent=43 // pred_check
          %p292 = pneg %p132
        $region54: #{tpu_custom_call.1} parent=43 // pred_check_branch
          %294 = sbr.rel (%p292) target = $region56
        $region55: #{tpu_custom_call.1} parent=43 // pred_region
          %295 = dma.done [#allocation6], 512
        $region56: #{tpu_custom_call.1} parent=43 // pred_fallthru
          _
        %p296 = scmp.lt.s32.totalorder %s27, 1
        %s297 = scalar_select %p296, %s27, 1
        %s298 = smul.addr %s297, 4
        %s299 = smul.addr %s298, 8
        %s300 = scalar_lea.vmem %s0, %s299
        %p301 = pneg %p48
        %p302 = pneg %p45
        %p303 = pneg %p69
        %p304 = pneg %p66
        %p305 = pneg %p90
        %p306 = pneg %p87
        %p307 = pneg %p111
        %p308 = pneg %p108
        %p309 = pneg %p132
        %p310 = pneg %p129
        %p311 = pneg %p153
        %p312 = pneg %p150
        %p313 = pneg %p179
        %p314 = pneg %p176
        %s315 = sand.u32 %s166, 1
        %s316 = scalar_lea.sflag [#allocation4], %s315
        %s317 = sand.u32 %s166, 1
        %s318 = smul.addr %s317, 32
        %s319 = scalar_lea.vmem [#allocation8], %s318
        %p320 = pneg %p205
        %p321 = pneg %p202
        %s322 = sand.u32 %s192, 1
        %s323 = scalar_lea.sflag [#allocation10], %s322
        %s324 = sand.u32 %s192, 1
        %s325 = smul.addr %s324, 32
        %s326 = scalar_lea.vmem [#allocation9], %s325
        %p327 = scmp.lt.s32.totalorder %s27, 1
        %s328 = scalar_select %p327, %s27, 1
        %s329 = smul.addr %s328, 4
        %s330 = smul.addr %s329, 8
        %s331 = scalar_lea.vmem %s0, %s330
        %v332 = vld [vmem:[%s331] sm:$0xff]
        %v333 = vld [vmem:[%s331 + $0x8] sm:$0xff]
        %v334 = vld [vmem:[%s331 + $0x10] sm:$0xff]
        %v335 = vld [vmem:[%s331 + $0x18] sm:$0xff]
        %340 = vrot.lane.b32.xlu0 %v332, 126
        %v341 = vpop.permute.xlu0 %340
        %342 = vrot.lane.b32.xlu0 %v333, 126
        %v343 = vpop.permute.xlu0 %342
        %344 = vrot.lane.b32.xlu0 %v334, 126
        %v345 = vpop.permute.xlu0 %344
        %346 = vrot.lane.b32.xlu0 %v335, 126
        %v347 = vpop.permute.xlu0 %346
        %v352 = vld [vmem:[#allocation2] sm:$0xff]
        %v353 = vld [vmem:[#allocation2 + $0x8] sm:$0xff]
        %v354 = vld [vmem:[#allocation2 + $0x10] sm:$0xff]
        %v355 = vld [vmem:[#allocation2 + $0x18] sm:$0xff]
        %vm356 = vcmask 523264
        %v358 = vsel %vm356, %v352, 0
        %v361 = vsel %vm356, %v353, 0
        %v364 = vsel %vm356, %v354, 0
        %v367 = vsel %vm356, %v355, 0
        %369 = vmatprep.subr.mxu0 0.0
        %370 = vmatpush1.msra.mxu0 0.0
        %371 = vmatprep.subr.mxu0 0.0
        %372 = vmatpush1.msra.mxu0 0.0
        %373 = vmatprep.subr.mxu0 0.0
        %374 = vmatpush1.msra.mxu0 0.0
        %375 = vmatprep.subr.mxu0 0.0
        %376 = vmatpush1.msra.mxu0 0.0
        %377 = vmatprep.subr.mxu0 0.0
        %378 = vmatpush1.msra.mxu0 0.0
        %379 = vmatprep.subr.mxu0 0.0
        %380 = vmatpush1.msra.mxu0 0.0
        %381 = vmatprep.subr.mxu0 0.0
        %382 = vmatpush1.msra.mxu0 0.0
        %383 = vmatprep.subr.mxu0 0.0
        %384 = vmatpush1.msra.mxu0 0.0
        %385 = vmatprep.subr.mxu0 0.0
        %386 = vmatpush1.msra.mxu0 %v347
        %387 = vmatprep.subr.mxu0 0.0
        %388 = vmatpush1.msra.mxu0 %v345
        %389 = vmatprep.subr.mxu0 0.0
        %390 = vmatpush1.msra.mxu0 %v343
        %391 = vmatprep.subr.mxu0 0.0
        %392 = vmatpush1.msra.mxu0 %v341
        %393 = vmatprep.subr.mxu0 0.0
        %394 = vmatpush1.msra.mxu0 %v335
        %395 = vmatprep.subr.mxu0 0.0
        %396 = vmatpush1.msra.mxu0 %v334
        %397 = vmatprep.subr.mxu0 0.0
        %398 = vmatpush1.msra.mxu0 %v333
        %399 = vmatprep.subr.mxu0 0.0
        %400 = vmatpush1.msra.mxu0 %v332
        %401 = vmatprep.subr.mxu0 0.0
        %402 = vmatpush2.msra.mxu0 0.0
        %403 = vmatprep.subr.mxu0 0.0
        %404 = vmatpush2.msra.mxu0 0.0
        %405 = vmatprep.subr.mxu0 0.0
        %406 = vmatpush2.msra.mxu0 0.0
        %407 = vmatprep.subr.mxu0 0.0
        %408 = vmatpush2.msra.mxu0 0.0
        %409 = vmatprep.subr.mxu0 0.0
        %410 = vmatpush2.msra.mxu0 0.0
        %411 = vmatprep.subr.mxu0 0.0
        %412 = vmatpush2.msra.mxu0 0.0
        %413 = vmatprep.subr.mxu0 0.0
        %414 = vmatpush2.msra.mxu0 0.0
        %415 = vmatprep.subr.mxu0 0.0
        %416 = vmatpush2.msra.mxu0 0.0
        %417 = vmatprep.subr.mxu0 0.0
        %418 = vmatpush2.msra.mxu0 0.0
        %419 = vmatprep.subr.mxu0 0.0
        %420 = vmatpush2.msra.mxu0 0.0
        %421 = vmatprep.subr.mxu0 0.0
        %422 = vmatpush2.msra.mxu0 0.0
        %423 = vmatprep.subr.mxu0 0.0
        %424 = vmatpush2.msra.mxu0 0.0
        %425 = vmatprep.subr.mxu0 0.0
        %426 = vmatpush2.msra.mxu0 0.0
        %427 = vmatprep.subr.mxu0 0.0
        %428 = vmatpush2.msra.mxu0 0.0
        %429 = vmatprep.subr.mxu0 0.0
        %430 = vmatpush2.msra.mxu0 0.0
        %431 = vmatprep.subr.mxu0 0.0
        %432 = vmatpush2.msra.mxu0 0.0
        %433 = vmatprep.mubr.f32.mxu0 0.0
        %434 = vmatmul.mubr.f32.gmra.mxu0 %v358
        %v435 = vpop.f32.mrf.mxu0
        %v436 = vadd.f32 0.0, %v435
        %v437 = vpop.f32.mrf.mxu0
        %438 = vmatprep.mubr.f32.mxu0 0.0
        %439 = vmatmul.mubr.f32.gmra.mxu0 %v361
        %v440 = vpop.f32.mrf.mxu0
        %v441 = vadd.f32 0.0, %v440
        %v442 = vpop.f32.mrf.mxu0
        %443 = vmatprep.mubr.f32.mxu0 0.0
        %444 = vmatmul.mubr.f32.gmra.mxu0 %v364
        %v445 = vpop.f32.mrf.mxu0
        %v446 = vadd.f32 0.0, %v445
        %v447 = vpop.f32.mrf.mxu0
        %448 = vmatprep.mubr.f32.mxu0 0.0
        %449 = vmatmul.mubr.f32.gmra.mxu0 %v367
        %v450 = vpop.f32.mrf.mxu0
        %v451 = vadd.f32 0.0, %v450
        %v452 = vpop.f32.mrf.mxu0
        %453 = vdwg.mxu0
        %v454 = vmul.f32 %v436, 0.5
        %v455 = vmul.f32 %v441, 0.5
        %v456 = vmul.f32 %v446, 0.5
        %v457 = vmul.f32 %v451, 0.5
        %v458 = vtanh.pop %v454
        %v459 = vtanh.pop %v455
        %v460 = vtanh.pop %v456
        %v461 = vtanh.pop %v457
        %v462 = vmul.f32 %v458, %v458
        %v463 = vmul.f32 %v459, %v459
        %v464 = vmul.f32 %v460, %v460
        %v465 = vmul.f32 %v461, %v461
        %v466 = vadd.f32 %v458, %v462
        %v467 = vadd.f32 %v459, %v463
        %v468 = vadd.f32 %v460, %v464
        %v469 = vadd.f32 %v461, %v465
        %v470 = vadd.f32 %v462, 1.0
        %v471 = vadd.f32 %v463, 1.0
        %v472 = vadd.f32 %v464, 1.0
        %v473 = vadd.f32 %v465, 1.0
        %v474 = vrcp.pop %v470
        %v475 = vmul.f32 %v466, %v474
        %v476 = vrcp.pop %v471
        %v477 = vmul.f32 %v467, %v476
        %v478 = vrcp.pop %v472
        %v479 = vmul.f32 %v468, %v478
        %v480 = vrcp.pop %v473
        %v481 = vmul.f32 %v469, %v480
        %v482 = vld [vmem:[#allocation5] sm:$0xff]
        %v483 = vld [vmem:[#allocation5 + $0x8] sm:$0xff]
        %v484 = vld [vmem:[#allocation5 + $0x10] sm:$0xff]
        %v485 = vld [vmem:[#allocation5 + $0x18] sm:$0xff]
        %v486 = vld [vmem:[%s3] sm:$0xff]
        %v487 = vld [vmem:[%s3 + $0x8] sm:$0xff]
        %v488 = vld [vmem:[%s3 + $0x10] sm:$0xff]
        %v489 = vld [vmem:[%s3 + $0x18] sm:$0xff]
        %491 = vset.pattern.permute.xlu0 0
        %492 = vperm.xlu0 %491, %v486
        %v493 = vpop.permute.xlu0 %492
        %496 = vset.pattern.permute.xlu0 0
        %497 = vperm.xlu0 %496, %v487
        %v498 = vpop.permute.xlu0 %497
        %501 = vset.pattern.permute.xlu0 0
        %502 = vperm.xlu0 %501, %v488
        %v503 = vpop.permute.xlu0 %502
        %506 = vset.pattern.permute.xlu0 0
        %507 = vperm.xlu0 %506, %v489
        %v508 = vpop.permute.xlu0 %507
        %vm510 = vcmask 261120
        %v512 = vsel %vm510, %v482, 0
        %v515 = vsel %vm510, %v483, 0
        %v518 = vsel %vm510, %v484, 0
        %v521 = vsel %vm510, %v485, 0
        %523 = vmatprep.subr.mxu0 0.0
        %524 = vmatpush1.msra.mxu0 0.0
        %525 = vmatprep.subr.mxu0 0.0
        %526 = vmatpush1.msra.mxu0 0.0
        %527 = vmatprep.subr.mxu0 0.0
        %528 = vmatpush1.msra.mxu0 0.0
        %529 = vmatprep.subr.mxu0 0.0
        %530 = vmatpush1.msra.mxu0 0.0
        %531 = vmatprep.subr.mxu0 0.0
        %532 = vmatpush1.msra.mxu0 0.0
        %533 = vmatprep.subr.mxu0 0.0
        %534 = vmatpush1.msra.mxu0 0.0
        %535 = vmatprep.subr.mxu0 0.0
        %536 = vmatpush1.msra.mxu0 0.0
        %537 = vmatprep.subr.mxu0 0.0
        %538 = vmatpush1.msra.mxu0 0.0
        %539 = vmatprep.subr.mxu0 0.0
        %540 = vmatpush1.msra.mxu0 0.0
        %541 = vmatprep.subr.mxu0 0.0
        %542 = vmatpush1.msra.mxu0 0.0
        %543 = vmatprep.subr.mxu0 0.0
        %544 = vmatpush1.msra.mxu0 0.0
        %545 = vmatprep.subr.mxu0 0.0
        %546 = vmatpush1.msra.mxu0 0.0
        %547 = vmatprep.subr.mxu0 0.0
        %548 = vmatpush1.msra.mxu0 %v481
        %549 = vmatprep.subr.mxu0 0.0
        %550 = vmatpush1.msra.mxu0 %v479
        %551 = vmatprep.subr.mxu0 0.0
        %552 = vmatpush1.msra.mxu0 %v477
        %553 = vmatprep.subr.mxu0 0.0
        %554 = vmatpush1.msra.mxu0 %v475
        %555 = vmatprep.subr.mxu0 0.0
        %556 = vmatpush2.msra.mxu0 0.0
        %557 = vmatprep.subr.mxu0 0.0
        %558 = vmatpush2.msra.mxu0 0.0
        %559 = vmatprep.subr.mxu0 0.0
        %560 = vmatpush2.msra.mxu0 0.0
        %561 = vmatprep.subr.mxu0 0.0
        %562 = vmatpush2.msra.mxu0 0.0
        %563 = vmatprep.subr.mxu0 0.0
        %564 = vmatpush2.msra.mxu0 0.0
        %565 = vmatprep.subr.mxu0 0.0
        %566 = vmatpush2.msra.mxu0 0.0
        %567 = vmatprep.subr.mxu0 0.0
        %568 = vmatpush2.msra.mxu0 0.0
        %569 = vmatprep.subr.mxu0 0.0
        %570 = vmatpush2.msra.mxu0 0.0
        %571 = vmatprep.subr.mxu0 0.0
        %572 = vmatpush2.msra.mxu0 0.0
        %573 = vmatprep.subr.mxu0 0.0
        %574 = vmatpush2.msra.mxu0 0.0
        %575 = vmatprep.subr.mxu0 0.0
        %576 = vmatpush2.msra.mxu0 0.0
        %577 = vmatprep.subr.mxu0 0.0
        %578 = vmatpush2.msra.mxu0 0.0
        %579 = vmatprep.subr.mxu0 0.0
        %580 = vmatpush2.msra.mxu0 0.0
        %581 = vmatprep.subr.mxu0 0.0
        %582 = vmatpush2.msra.mxu0 0.0
        %583 = vmatprep.subr.mxu0 0.0
        %584 = vmatpush2.msra.mxu0 0.0
        %585 = vmatprep.subr.mxu0 0.0
        %586 = vmatpush2.msra.mxu0 0.0
        %587 = vmatprep.mubr.f32.mxu0 0.0
        %588 = vmatmul.mubr.f32.gmra.mxu0 %v512
        %v589 = vpop.f32.mrf.mxu0
        %v590 = vadd.f32 %v493, %v589
        %v591 = vpop.f32.mrf.mxu0
        %592 = vmatprep.mubr.f32.mxu0 0.0
        %593 = vmatmul.mubr.f32.gmra.mxu0 %v515
        %v594 = vpop.f32.mrf.mxu0
        %v595 = vadd.f32 %v498, %v594
        %v596 = vpop.f32.mrf.mxu0
        %597 = vmatprep.mubr.f32.mxu0 0.0
        %598 = vmatmul.mubr.f32.gmra.mxu0 %v518
        %v599 = vpop.f32.mrf.mxu0
        %v600 = vadd.f32 %v503, %v599
        %v601 = vpop.f32.mrf.mxu0
        %602 = vmatprep.mubr.f32.mxu0 0.0
        %603 = vmatmul.mubr.f32.gmra.mxu0 %v521
        %v604 = vpop.f32.mrf.mxu0
        %v605 = vadd.f32 %v508, %v604
        %v606 = vpop.f32.mrf.mxu0
        %607 = vdwg.mxu0
        %v608 = vadd.f32 %v590, %v341
        %v609 = vadd.f32 %v595, %v343
        %v610 = vadd.f32 %v600, %v345
        %v611 = vadd.f32 %v605, %v347
        %vm612 = vcmask 506880
        %613 = vst.msk [vmem:[%s319] sm:$0xff] %vm612, %v608
        %614 = vst.msk [vmem:[%s319 + $0x8] sm:$0xff] %vm612, %v609
        %615 = vst.msk [vmem:[%s319 + $0x10] sm:$0xff] %vm612, %v610
        %616 = vst.msk [vmem:[%s319 + $0x18] sm:$0xff] %vm612, %v611
        %v617 = vld [vmem:[#allocation7] sm:$0xff]
        %v618 = vld [vmem:[#allocation7 + $0x8] sm:$0xff]
        %v619 = vld [vmem:[#allocation7 + $0x10] sm:$0xff]
        %v620 = vld [vmem:[#allocation7 + $0x18] sm:$0xff]
        %v621 = vld [vmem:[%s5] sm:$0xff]
        %v622 = vld [vmem:[%s5 + $0x8] sm:$0xff]
        %v623 = vld [vmem:[%s5 + $0x10] sm:$0xff]
        %v624 = vld [vmem:[%s5 + $0x18] sm:$0xff]
        %626 = vset.pattern.permute.xlu0 0
        %627 = vperm.xlu0 %626, %v621
        %v628 = vpop.permute.xlu0 %627
        %631 = vset.pattern.permute.xlu0 0
        %632 = vperm.xlu0 %631, %v622
        %v633 = vpop.permute.xlu0 %632
        %636 = vset.pattern.permute.xlu0 0
        %637 = vperm.xlu0 %636, %v623
        %v638 = vpop.permute.xlu0 %637
        %641 = vset.pattern.permute.xlu0 0
        %642 = vperm.xlu0 %641, %v624
        %v643 = vpop.permute.xlu0 %642
        %649 = vrot.lane.b32.xlu0 %v475, 98
        %v650 = vpop.permute.xlu0 %649
        %651 = vrot.lane.b32.xlu0 %v477, 98
        %v652 = vpop.permute.xlu0 %651
        %653 = vrot.lane.b32.xlu0 %v479, 98
        %v654 = vpop.permute.xlu0 %653
        %655 = vrot.lane.b32.xlu0 %v481, 98
        %v656 = vpop.permute.xlu0 %655
        %v662 = vsel %vm510, %v617, 0
        %v665 = vsel %vm510, %v618, 0
        %v668 = vsel %vm510, %v619, 0
        %v671 = vsel %vm510, %v620, 0
        %673 = vmatprep.subr.mxu0 0.0
        %674 = vmatpush1.msra.mxu0 0.0
        %675 = vmatprep.subr.mxu0 0.0
        %676 = vmatpush1.msra.mxu0 0.0
        %677 = vmatprep.subr.mxu0 0.0
        %678 = vmatpush1.msra.mxu0 0.0
        %679 = vmatprep.subr.mxu0 0.0
        %680 = vmatpush1.msra.mxu0 0.0
        %681 = vmatprep.subr.mxu0 0.0
        %682 = vmatpush1.msra.mxu0 0.0
        %683 = vmatprep.subr.mxu0 0.0
        %684 = vmatpush1.msra.mxu0 0.0
        %685 = vmatprep.subr.mxu0 0.0
        %686 = vmatpush1.msra.mxu0 0.0
        %687 = vmatprep.subr.mxu0 0.0
        %688 = vmatpush1.msra.mxu0 0.0
        %689 = vmatprep.subr.mxu0 0.0
        %690 = vmatpush1.msra.mxu0 0.0
        %691 = vmatprep.subr.mxu0 0.0
        %692 = vmatpush1.msra.mxu0 0.0
        %693 = vmatprep.subr.mxu0 0.0
        %694 = vmatpush1.msra.mxu0 0.0
        %695 = vmatprep.subr.mxu0 0.0
        %696 = vmatpush1.msra.mxu0 0.0
        %697 = vmatprep.subr.mxu0 0.0
        %698 = vmatpush1.msra.mxu0 %v656
        %699 = vmatprep.subr.mxu0 0.0
        %700 = vmatpush1.msra.mxu0 %v654
        %701 = vmatprep.subr.mxu0 0.0
        %702 = vmatpush1.msra.mxu0 %v652
        %703 = vmatprep.subr.mxu0 0.0
        %704 = vmatpush1.msra.mxu0 %v650
        %705 = vmatprep.subr.mxu0 0.0
        %706 = vmatpush2.msra.mxu0 0.0
        %707 = vmatprep.subr.mxu0 0.0
        %708 = vmatpush2.msra.mxu0 0.0
        %709 = vmatprep.subr.mxu0 0.0
        %710 = vmatpush2.msra.mxu0 0.0
        %711 = vmatprep.subr.mxu0 0.0
        %712 = vmatpush2.msra.mxu0 0.0
        %713 = vmatprep.subr.mxu0 0.0
        %714 = vmatpush2.msra.mxu0 0.0
        %715 = vmatprep.subr.mxu0 0.0
        %716 = vmatpush2.msra.mxu0 0.0
        %717 = vmatprep.subr.mxu0 0.0
        %718 = vmatpush2.msra.mxu0 0.0
        %719 = vmatprep.subr.mxu0 0.0
        %720 = vmatpush2.msra.mxu0 0.0
        %721 = vmatprep.subr.mxu0 0.0
        %722 = vmatpush2.msra.mxu0 0.0
        %723 = vmatprep.subr.mxu0 0.0
        %724 = vmatpush2.msra.mxu0 0.0
        %725 = vmatprep.subr.mxu0 0.0
        %726 = vmatpush2.msra.mxu0 0.0
        %727 = vmatprep.subr.mxu0 0.0
        %728 = vmatpush2.msra.mxu0 0.0
        %729 = vmatprep.subr.mxu0 0.0
        %730 = vmatpush2.msra.mxu0 0.0
        %731 = vmatprep.subr.mxu0 0.0
        %732 = vmatpush2.msra.mxu0 0.0
        %733 = vmatprep.subr.mxu0 0.0
        %734 = vmatpush2.msra.mxu0 0.0
        %735 = vmatprep.subr.mxu0 0.0
        %736 = vmatpush2.msra.mxu0 0.0
        %737 = vmatprep.mubr.f32.mxu0 0.0
        %738 = vmatmul.mubr.f32.gmra.mxu0 %v662
        %v739 = vpop.f32.mrf.mxu0
        %v740 = vadd.f32 %v628, %v739
        %v741 = vpop.f32.mrf.mxu0
        %742 = vmatprep.mubr.f32.mxu0 0.0
        %743 = vmatmul.mubr.f32.gmra.mxu0 %v665
        %v744 = vpop.f32.mrf.mxu0
        %v745 = vadd.f32 %v633, %v744
        %v746 = vpop.f32.mrf.mxu0
        %747 = vmatprep.mubr.f32.mxu0 0.0
        %748 = vmatmul.mubr.f32.gmra.mxu0 %v668
        %v749 = vpop.f32.mrf.mxu0
        %v750 = vadd.f32 %v638, %v749
        %v751 = vpop.f32.mrf.mxu0
        %752 = vmatprep.mubr.f32.mxu0 0.0
        %753 = vmatmul.mubr.f32.gmra.mxu0 %v671
        %v754 = vpop.f32.mrf.mxu0
        %v755 = vadd.f32 %v643, %v754
        %v756 = vpop.f32.mrf.mxu0
        %757 = vdwg.mxu0
        %758 = vst.msk [vmem:[%s326] sm:$0xff] %vm510, %v740
        %759 = vst.msk [vmem:[%s326 + $0x8] sm:$0xff] %vm510, %v745
        %760 = vst.msk [vmem:[%s326 + $0x10] sm:$0xff] %vm510, %v750
        %761 = vst.msk [vmem:[%s326 + $0x18] sm:$0xff] %vm510, %v755
        %s762 = sand.u32 %s166, 1
        %s763 = scalar_lea.sflag [#allocation4], %s762
        %s764 = sand.u32 %s166, 1
        %s765 = smul.addr %s764, 32
        %s766 = scalar_lea.vmem [#allocation8], %s765
        %s767 = sand.u32 %s192, 1
        %s768 = scalar_lea.sflag [#allocation10], %s767
        %s769 = sand.u32 %s192, 1
        %s770 = smul.addr %s769, 32
        %s771 = scalar_lea.vmem [#allocation9], %s770
        // Predicated region
        $region57: #{tpu_custom_call.1} parent=43 // pred_check
          %p772 = pneg %p176
        $region58: #{tpu_custom_call.1} parent=43 // pred_check_branch
          %774 = sbr.rel (%p772) target = $region60
        $region59: #{tpu_custom_call.1} parent=43 // pred_region
          %s776 = ssub.s32 512, 512
          %777 = vsyncadd %s763, %s776
          %s778 = smul.addr %s27, 4
          %s779 = smul.addr %s778, 128
          %s780 = scalar_lea.hbm %s6, %s779
          %s781 = sshll.u32 %s766, 4
          %s782 = int_to_ptr.vmem [resolvable:$true] %s781
          %787 = dma.vmem_to_hbm [thread:$0]  %s782, 512, %s780, %s763, 128, 128, 8
        $region60: #{tpu_custom_call.1} parent=43 // pred_fallthru
          _
        // Predicated region
        $region61: #{tpu_custom_call.1} parent=43 // pred_check
          %p788 = pneg %p202
        $region62: #{tpu_custom_call.1} parent=43 // pred_check_branch
          %790 = sbr.rel (%p788) target = $region64
        $region63: #{tpu_custom_call.1} parent=43 // pred_region
          %s792 = ssub.s32 512, 512
          %793 = vsyncadd %s768, %s792
          %s794 = smul.addr %s27, 4
          %s795 = smul.addr %s794, 128
          %s796 = scalar_lea.hbm %s7, %s795
          %s797 = sshll.u32 %s771, 4
          %s798 = int_to_ptr.vmem [resolvable:$true] %s797
          %803 = dma.vmem_to_hbm [thread:$0]  %s798, 512, %s796, %s768, 128, 128, 8
        $region64: #{tpu_custom_call.1} parent=43 // pred_fallthru
          _
      $region44: #{tpu_custom_call.1} parent=5 // pred_fallthru
        _
      %p804 = scmp.le.s32.totalorder 2, %s22
      // Predicated region
      $region65: #{tpu_custom_call.1} parent=5 // pred_check
        %p805 = pneg %p804
      $region66: #{tpu_custom_call.1} parent=5 // pred_check_branch
        %807 = sbr.rel (%p805) target = $region68
      $region67: #{tpu_custom_call.1} parent=5 // pred_region
        %s808 = ssub.s32 %s22, 2
        // Predicated region
        $region69: #{tpu_custom_call.1} parent=67 // pred_check
          %p809 = pneg %p182
        $region70: #{tpu_custom_call.1} parent=67 // pred_check_branch
          %811 = sbr.rel (%p809) target = $region72
        $region71: #{tpu_custom_call.1} parent=67 // pred_region
          %s812 = sand.u32 %s167, 1
          %s813 = scalar_lea.sflag [#allocation4], %s812
          %s814 = sand.u32 %s167, 1
          %s815 = smul.addr %s814, 32
          %s816 = scalar_lea.vmem [#allocation8], %s815
          %817 = dma.done %s813, 512
        $region72: #{tpu_custom_call.1} parent=67 // pred_fallthru
          _
        // Predicated region
        $region73: #{tpu_custom_call.1} parent=67 // pred_check
          %p818 = pneg %p208
        $region74: #{tpu_custom_call.1} parent=67 // pred_check_branch
          %820 = sbr.rel (%p818) target = $region76
        $region75: #{tpu_custom_call.1} parent=67 // pred_region
          %s821 = sand.u32 %s193, 1
          %s822 = scalar_lea.sflag [#allocation10], %s821
          %s823 = sand.u32 %s193, 1
          %s824 = smul.addr %s823, 32
          %s825 = scalar_lea.vmem [#allocation9], %s824
          %826 = dma.done %s822, 512
        $region76: #{tpu_custom_call.1} parent=67 // pred_fallthru
          _
      $region68: #{tpu_custom_call.1} parent=5 // pred_fallthru
        _
    $region6: #{tpu_custom_call.1} parent=1 // loop_footer
      %s26 = sadd.s32 1, %s22
    $region7: #{tpu_custom_call.1} parent=1 // loop_footer_branch
      %21 = sbr.rel target = $region3
    $region8: #{tpu_custom_call.1} parent=1 // loop_exit
      _
    %827 = vsyncpa [#allocation3], 1
    %s828 = scalar_lea.sflag [#allocation3], 1
    %829 = vsyncpa %s828, 1
    %830 = vsyncpa [#allocation6], 1
    %831 = vsyncpa [#allocation4], 1
    %s832 = scalar_lea.sflag [#allocation4], 1
    %833 = vsyncpa %s832, 1
    %834 = vsyncpa [#allocation10], 1
    %s835 = scalar_lea.sflag [#allocation10], 1
    %836 = vsyncpa %s835, 1

</llo_original>
